<compile_context>
chip_gen: v5e
topology: v5e:2x2
jax: 0.10.0
libtpu: 0.0.40
codegen_flags: <defaults>
</compile_context>

<pallas_src>
import functools
import math

import jax
import jax.numpy as jnp
from jax.experimental import pallas as pl
from jax.experimental.pallas import tpu as pltpu


def _round_up(x, m):
    return (x + m - 1) // m * m


def _cdiv(a, b):
    return -(-a // b)


def _num_tensorcores():
    """Best-effort TensorCore count per device (v5e/v6e: 1, v7x/v4/v5p: 2)."""
    try:
        info = pltpu.get_tpu_info()
        for attr in ("num_cores", "core_count", "num_tensorcores", "tensorcore_count"):
            v = getattr(info, attr, None)
            if isinstance(v, int) and v > 0:
                return v
    except Exception:
        pass
    try:
        kind = jax.devices()[0].device_kind.lower()
        if "v7" in kind or "7x" in kind or "v4" in kind or "v5p" in kind or "v5 p" in kind:
            return 2
    except Exception:
        pass
    return 1


def dqn_kernel(x_ref, w1_ref, w2_ref, w3_ref, b_ref, out_ref, *,
               off1, off2, off3, n_actions):
    """Fused 3-layer MLP forward for one batch tile.

    Weights may be bf16 (MXU-native); matmuls accumulate in f32 and the
    bias-add / ReLU epilogue stays in f32.  Only the first n_actions output
    columns are stored (narrow, unpadded output).
    """
    w_dtype = w1_ref.dtype
    fc1 = w1_ref.shape[1]
    fc2 = w2_ref.shape[1]
    out_cols = w3_ref.shape[1]   # lane-padded multiple of 128 (matmul slab stays lane-dense)

    # Static (compile-time) slices into the single packed bias buffer.
    b1 = b_ref[:, off1:off1 + fc1]
    b2 = b_ref[:, off2:off2 + fc2]
    b3 = b_ref[:, off3:off3 + out_cols]

    x = x_ref[...].astype(w_dtype)

    # fc1 + ReLU
    h1 = jnp.dot(x, w1_ref[...], preferred_element_type=jnp.float32) + b1
    h1 = jnp.maximum(h1, 0.0)

    # fc2 + ReLU
    h2 = jnp.dot(h1.astype(w_dtype), w2_ref[...], preferred_element_type=jnp.float32) + b2
    h2 = jnp.maximum(h2, 0.0)

    # fc3 (raw action values); store only the real columns — no padded Q slab.
    acts = jnp.dot(h2.astype(w_dtype), w3_ref[...], preferred_element_type=jnp.float32) + b3
    out_ref[...] = acts[:, :n_actions].astype(out_ref.dtype)


def init_dqn_params(key, input_dims, fc1_dims, fc2_dims, n_actions):
    """nn.Linear default init (U[-1/sqrt(fan_in), 1/sqrt(fan_in)]).
    Weights are stored [in_features, out_features] (transposed vs. PyTorch)."""
    def linear(key, fan_in, fan_out):
        kw, kb = jax.random.split(key)
        bound = 1.0 / math.sqrt(fan_in)
        w = jax.random.uniform(kw, (fan_in, fan_out), jnp.float32, -bound, bound)
        b = jax.random.uniform(kb, (1, fan_out), jnp.float32, -bound, bound)
        return w, b

    k1, k2, k3 = jax.random.split(key, 3)
    w1, b1 = linear(k1, input_dims, fc1_dims)
    w2, b2 = linear(k2, fc1_dims, fc2_dims)
    w3, b3 = linear(k3, fc2_dims, n_actions)
    return {"w1": w1, "b1": b1, "w2": w2, "b2": b2, "w3": w3, "b3": b3}


def pack_params(params, *, weight_dtype=jnp.bfloat16):
    """Pack params into 4 kernel operands: w1, w2, w3 (lane-padded), one bias buffer.

    bf16 weights are the default (MXU-native on v5e/v6e/v7x; the kernel keeps
    accumulation and the bias+ReLU epilogue in f32).  Do this once per weight
    update — not per forward call."""
    w1 = params["w1"].astype(weight_dtype)
    w2 = params["w2"].astype(weight_dtype)
    w3 = params["w3"]
    b1, b2, b3 = params["b1"], params["b2"], params["b3"]
    fc1, fc2, n_actions = w1.shape[1], w2.shape[1], w3.shape[1]

    # Lane-dense final matmul: pad w3 columns to a multiple of 128 with zeros.
    # (Only the matmul slab is padded; the HBM output is NOT.)
    out_cols = _round_up(n_actions, 128)
    w3p = jnp.zeros((w3.shape[0], out_cols), jnp.float32).at[:, :n_actions].set(w3)
    w3p = w3p.astype(weight_dtype)

    # One packed bias buffer; each segment starts at a 128-aligned lane offset.
    seg1, seg2, seg3 = _round_up(fc1, 128), _round_up(fc2, 128), out_cols
    biases = jnp.zeros((1, seg1 + seg2 + seg3), jnp.float32)
    biases = biases.at[:, 0:fc1].set(b1.reshape(1, fc1))
    biases = biases.at[:, seg1:seg1 + fc2].set(b2.reshape(1, fc2))
    biases = biases.at[:, seg1 + seg2:seg1 + seg2 + n_actions].set(b3.reshape(1, n_actions))

    meta = {"n_actions": n_actions, "out_cols": out_cols, "offsets": (0, seg1, seg1 + seg2)}
    return {"w1": w1, "w2": w2, "w3": w3p, "b": biases}, meta


def dqn_forward(state, packed, meta, *, max_batch_tile=2048, out_dtype=jnp.float32,
                num_tensorcores=None):
    """state: [B, input_dims] f32. Returns [B, n_actions] action values (out_dtype)."""
    w1, w2, w3, b = packed["w1"], packed["w2"], packed["w3"], packed["b"]
    B, in_dims = state.shape
    n_actions, out_cols = meta["n_actions"], meta["out_cols"]
    off1, off2, off3 = meta["offsets"]
    fc1, fc2 = w1.shape[1], w2.shape[1]

    # Generation-aware tile policy: one grid step per TensorCore (v5e/v6e run a
    # single big tile; dual-TC chips get a grid length of 2), capped so VMEM
    # stays a few MB.  Weights are DMA'd once and stay VMEM-resident.
    n_cores = num_tensorcores if num_tensorcores is not None else _num_tensorcores()
    B_pad = _round_up(max(B, 8), 8)
    tb = _round_up(_cdiv(B_pad, max(1, n_cores)), 8)
    tb = min(tb, max_batch_tile)
    B_pad = _round_up(B_pad, tb)
    if B_pad != B:
        state = jnp.zeros((B_pad, in_dims), state.dtype).at[:B].set(state)

    kernel = functools.partial(dqn_kernel, off1=off1, off2=off2, off3=off3,
                               n_actions=n_actions)

    itemsize = lambda a: int(a.size) * a.dtype.itemsize
    cost = pl.CostEstimate(
        flops=2 * B_pad * (in_dims * fc1 + fc1 * fc2 + fc2 * out_cols),
        transcendentals=0,
        bytes_accessed=(itemsize(state) + itemsize(w1) + itemsize(w2) + itemsize(w3)
                        + itemsize(b) + B_pad * n_actions * jnp.dtype(out_dtype).itemsize),
    )

    out = pl.pallas_call(
        kernel,
        out_shape=jax.ShapeDtypeStruct((B_pad, n_actions), out_dtype),
        grid=(B_pad // tb,),
        in_specs=[
            pl.BlockSpec((tb, in_dims), lambda i: (i, 0)),     # batch tile of states
            pl.BlockSpec(w1.shape, lambda i: (0, 0)),          # weights: VMEM-resident
            pl.BlockSpec(w2.shape, lambda i: (0, 0)),
            pl.BlockSpec(w3.shape, lambda i: (0, 0)),
            pl.BlockSpec(b.shape, lambda i: (0, 0)),           # packed biases
        ],
        out_specs=pl.BlockSpec((tb, n_actions), lambda i: (i, 0)),  # narrow output
        compiler_params=pltpu.CompilerParams(
            dimension_semantics=("parallel",)),                # both TCs on dual-core chips
        cost_estimate=cost,
    )(state, w1, w2, w3, b)

    return out if B_pad == B else out[:B]


def dqn_reference(state, params):
    """Pure-JAX reference of the PyTorch forward (f32)."""
    h1 = jnp.maximum(state @ params["w1"] + params["b1"], 0.0)
    h2 = jnp.maximum(h1 @ params["w2"] + params["b2"], 0.0)
    return h2 @ params["w3"] + params["b3"]


if __name__ == "__main__":
    # Shapes consistent with DQN(lr, input_dims=(16,), fc1_dims=128,
    # fc2_dims=128, n_actions=8).
    INPUT_DIMS, FC1, FC2, N_ACTIONS = 16, 128, 128, 8

    key = jax.random.PRNGKey(0)
    k_params, k_small, k_big = jax.random.split(key, 3)
    params = init_dqn_params(k_params, INPUT_DIMS, FC1, FC2, N_ACTIONS)

    # --- 1) small inference batch (B=8), f32 weights: exact check -------------
    packed_f32, meta_f32 = pack_params(params, weight_dtype=jnp.float32)
    state_small = jax.random.normal(k_small, (8, INPUT_DIMS), dtype=jnp.float32)
    out_small = jax.block_until_ready(dqn_forward(state_small, packed_f32, meta_f32))
    ref_small = dqn_reference(state_small, params)
    assert out_small.shape == (8, N_ACTIONS)
    assert jnp.allclose(out_small, ref_small, atol=1e-5, rtol=1e-5)

    # --- 2) replay-sized batch (B=1024), f32 weights ---------------------------
    state_big = jax.random.normal(k_big, (1024, INPUT_DIMS), dtype=jnp.float32)
    out_big = jax.block_until_ready(dqn_forward(state_big, packed_f32, meta_f32))
    ref_big = dqn_reference(state_big, params)
    assert out_big.shape == (1024, N_ACTIONS)
    assert jnp.allclose(out_big, ref_big, atol=1e-4, rtol=1e-4)

    # --- 3) bf16 weights (default packing), f32 accumulation/epilogue ----------
    packed_bf16, meta_bf16 = pack_params(params)          # weight_dtype=bf16 default
    out_bf16 = jax.block_until_ready(dqn_forward(state_big, packed_bf16, meta_bf16))
    assert out_bf16.shape == (1024, N_ACTIONS)
    assert bool(jnp.all(jnp.isfinite(out_bf16)))
    assert jnp.allclose(out_bf16, ref_big, atol=1e-1, rtol=1e-1)

    # --- 4) bf16 Q output (halves output writeback when the consumer allows) ---
    out_q_bf16 = jax.block_until_ready(
        dqn_forward(state_big, packed_bf16, meta_bf16, out_dtype=jnp.bfloat16))
    assert out_q_bf16.shape == (1024, N_ACTIONS) and out_q_bf16.dtype == jnp.bfloat16
    assert jnp.allclose(out_q_bf16.astype(jnp.float32), ref_big, atol=2e-1, rtol=2e-1)

    # TODO(synk): Adam optimizer / MSELoss training step from the PyTorch module
    # are not part of the forward pass and are left to the host framework.
    print("KERNEL_OK")
</pallas_src>

<mosaic_0001>
module attributes {stable_mosaic.version = 11 : i64} {
  func.func @dqn_kernel(%arg0: i32, %arg1: memref<8x16xf32, #tpu.memory_space<vmem>>, %arg2: memref<16x128xf32, #tpu.memory_space<vmem>>, %arg3: memref<128x128xf32, #tpu.memory_space<vmem>>, %arg4: memref<128x128xf32, #tpu.memory_space<vmem>>, %arg5: memref<1x384xf32, #tpu.memory_space<vmem>>, %arg6: memref<8x8xf32, #tpu.memory_space<vmem>>) attributes {dimension_semantics = [#tpu.dimension_semantics<parallel>], iteration_bounds = array<i64: 1>, scalar_prefetch = 0 : i64, scratch_operands = 0 : i64, tpu.core_type = #tpu.core_type<tc>, window_params = [{transform_indices = @transform_0, window_bounds = array<i64: 8, 16>}, {pipeline_mode = #tpu.pipeline_mode<synchronous>, transform_indices = @transform_1, window_bounds = array<i64: 16, 128>}, {pipeline_mode = #tpu.pipeline_mode<synchronous>, transform_indices = @transform_2, window_bounds = array<i64: 128, 128>}, {pipeline_mode = #tpu.pipeline_mode<synchronous>, transform_indices = @transform_3, window_bounds = array<i64: 128, 128>}, {pipeline_mode = #tpu.pipeline_mode<synchronous>, transform_indices = @transform_4, window_bounds = array<i64: 1, 384>}, {transform_indices = @transform_5, window_bounds = array<i64: 8, 8>}]} {
    %c0 = arith.constant 0 : index
    %c0_0 = arith.constant 0 : index
    %0 = vector.load %arg5[%c0, %c0_0] : memref<1x384xf32, #tpu.memory_space<vmem>>, vector<1x128xf32>
    %c0_1 = arith.constant 0 : index
    %c128 = arith.constant 128 : index
    %1 = vector.load %arg5[%c0_1, %c128] : memref<1x384xf32, #tpu.memory_space<vmem>>, vector<1x128xf32>
    %c0_2 = arith.constant 0 : index
    %c256 = arith.constant 256 : index
    %2 = vector.load %arg5[%c0_2, %c256] : memref<1x384xf32, #tpu.memory_space<vmem>>, vector<1x128xf32>
    %c0_3 = arith.constant 0 : index
    %c0_4 = arith.constant 0 : index
    %3 = vector.load %arg1[%c0_3, %c0_4] : memref<8x16xf32, #tpu.memory_space<vmem>>, vector<8x16xf32>
    %c0_5 = arith.constant 0 : index
    %c0_6 = arith.constant 0 : index
    %4 = vector.load %arg2[%c0_5, %c0_6] : memref<16x128xf32, #tpu.memory_space<vmem>>, vector<16x128xf32>
    %cst = arith.constant dense<0.000000e+00> : vector<8x128xf32>
    %5 = tpu.matmul %3, %4, %cst {dimension_numbers = #tpu.dot_dimension_numbers<[1], [0], [0], [1], [0, 0, 1, 1], [], []>} : vector<8x16xf32>, vector<16x128xf32>, vector<8x128xf32> -> vector<8x128xf32>
    %6 = vector.broadcast %0 : vector<1x128xf32> to vector<8x128xf32>
    %7 = arith.addf %5, %6 : vector<8x128xf32>
    %cst_7 = arith.constant 0.000000e+00 : f32
    %8 = vector.broadcast %cst_7 : f32 to vector<8x128xf32>
    %9 = arith.maximumf %7, %8 : vector<8x128xf32>
    %c0_8 = arith.constant 0 : index
    %c0_9 = arith.constant 0 : index
    %10 = vector.load %arg3[%c0_8, %c0_9] : memref<128x128xf32, #tpu.memory_space<vmem>>, vector<128x128xf32>
    %cst_10 = arith.constant dense<0.000000e+00> : vector<8x128xf32>
    %11 = tpu.matmul %9, %10, %cst_10 {dimension_numbers = #tpu.dot_dimension_numbers<[1], [0], [0], [1], [0, 0, 1, 1], [], []>} : vector<8x128xf32>, vector<128x128xf32>, vector<8x128xf32> -> vector<8x128xf32>
    %12 = vector.broadcast %1 : vector<1x128xf32> to vector<8x128xf32>
    %13 = arith.addf %11, %12 : vector<8x128xf32>
    %cst_11 = arith.constant 0.000000e+00 : f32
    %14 = vector.broadcast %cst_11 : f32 to vector<8x128xf32>
    %15 = arith.maximumf %13, %14 : vector<8x128xf32>
    %c0_12 = arith.constant 0 : index
    %c0_13 = arith.constant 0 : index
    %16 = vector.load %arg4[%c0_12, %c0_13] : memref<128x128xf32, #tpu.memory_space<vmem>>, vector<128x128xf32>
    %cst_14 = arith.constant dense<0.000000e+00> : vector<8x128xf32>
    %17 = tpu.matmul %15, %16, %cst_14 {dimension_numbers = #tpu.dot_dimension_numbers<[1], [0], [0], [1], [0, 0, 1, 1], [], []>} : vector<8x128xf32>, vector<128x128xf32>, vector<8x128xf32> -> vector<8x128xf32>
    %18 = vector.broadcast %2 : vector<1x128xf32> to vector<8x128xf32>
    %19 = arith.addf %17, %18 : vector<8x128xf32>
    %20 = vector.extract_strided_slice %19 {offsets = [0, 0], sizes = [8, 8], strides = [1, 1]} : vector<8x128xf32> to vector<8x8xf32>
    %c0_15 = arith.constant 0 : index
    %c0_16 = arith.constant 0 : index
    %21 = vector.load %arg6[%c0_15, %c0_16] : memref<8x8xf32, #tpu.memory_space<vmem>>, vector<8x8xf32>
    tpu.vector_store %arg6[%c0_15, %c0_16], %20 {strides = array<i32>} : memref<8x8xf32, #tpu.memory_space<vmem>>, vector<8x8xf32>,
    return
  }
  func.func @transform_0(%arg0: i32) -> (i32, i32) {
    %c0_i32 = arith.constant 0 : i32
    %c0_i32_0 = arith.constant 0 : i32
    return %arg0, %c0_i32 : i32, i32
  }
  func.func @transform_1(%arg0: i32) -> (i32, i32) {
    %c0_i32 = arith.constant 0 : i32
    %c0_i32_0 = arith.constant 0 : i32
    %c0_i32_1 = arith.constant 0 : i32
    return %c0_i32, %c0_i32_0 : i32, i32
  }
  func.func @transform_2(%arg0: i32) -> (i32, i32) {
    %c0_i32 = arith.constant 0 : i32
    %c0_i32_0 = arith.constant 0 : i32
    %c0_i32_1 = arith.constant 0 : i32
    return %c0_i32, %c0_i32_0 : i32, i32
  }
  func.func @transform_3(%arg0: i32) -> (i32, i32) {
    %c0_i32 = arith.constant 0 : i32
    %c0_i32_0 = arith.constant 0 : i32
    %c0_i32_1 = arith.constant 0 : i32
    return %c0_i32, %c0_i32_0 : i32, i32
  }
  func.func @transform_4(%arg0: i32) -> (i32, i32) {
    %c0_i32 = arith.constant 0 : i32
    %c0_i32_0 = arith.constant 0 : i32
    %c0_i32_1 = arith.constant 0 : i32
    return %c0_i32, %c0_i32_0 : i32, i32
  }
  func.func @transform_5(%arg0: i32) -> (i32, i32) {
    %c0_i32 = arith.constant 0 : i32
    %c0_i32_0 = arith.constant 0 : i32
    return %arg0, %c0_i32 : i32, i32
  }
}

</mosaic_0001>

<llo_original>
// kernel: tpu_custom_call.1
$region0: #{tpu_custom_call.1}
  #allocation0 [shape = 'u32[]', space=smem, size = 0x4, offset = 0x4, fixed_abs, tag = 'smem constant byte address 0x4 - core index']
  #allocation1 [shape = 'u32[72,128]{1,0:T(1,128)}', space=vmem, size = 0x9000, scoped, tag = 'internal scratch']
  %s0 = inlined_call_operand.hbm [shape: f32[8,16], index: 0, kind: input, shape index: {}]
  %s1 = inlined_call_operand.hbm [shape: f32[16,128], index: 1, kind: input, shape index: {}]
  %s2 = inlined_call_operand.hbm [shape: f32[128,128], index: 2, kind: input, shape index: {}]
  %s3 = inlined_call_operand.hbm [shape: f32[128,128], index: 3, kind: input, shape index: {}]
  %s4 = inlined_call_operand.vmem [shape: f32[1,384], index: 4, kind: input, shape index: {}]
  %s5 = inlined_call_operand.hbm [shape: f32[8,8], index: 5, kind: output, shape index: {}]
  %s6 = sld [smem:[#allocation0]]
  $region46: #{tpu_custom_call.1} parent=0
    _
  %s8 = ssub.s32 1, %s6
  %s9 = scalar_select 0, %s8, %s6
  $region1: #{tpu_custom_call.1} parent=0
    #allocation2 [shape = 'u8[4096]{0}', space=vmem, size = 0x1000, scoped, tag = 'input window, operand 0, single buffered']
    #allocation3 [shape = 's32[1]{0}', space=sflag, size = 0x4, scoped, tag = 'scoped memory for tpu_custom_call.1']
    #allocation4 [shape = 's32[1]{0}', space=sflag, size = 0x4, scoped, tag = 'scoped memory for tpu_custom_call.1']
    #allocation5 [shape = 'u8[8192]{0}', space=vmem, size = 0x2000, scoped, tag = 'input window, operand 1, single buffered']
    #allocation6 [shape = 's32[1]{0}', space=sflag, size = 0x4, scoped, tag = 'scoped memory for tpu_custom_call.1']
    #allocation7 [shape = 'u8[65536]{0}', space=vmem, size = 0x10000, scoped, tag = 'input window, operand 2, single buffered']
    #allocation8 [shape = 'u8[65536]{0}', space=vmem, size = 0x10000, scoped, tag = 'input window, operand 3, single buffered']
    #allocation9 [shape = 's32[1]{0}', space=sflag, size = 0x4, scoped, tag = 'scoped memory for tpu_custom_call.1']
    #allocation10 [shape = 'u8[4096]{0}', space=vmem, size = 0x1000, scoped, tag = 'output window, operand 0, single buffered']
    %10 = vsyncpa [#allocation3], 0
    %11 = vsyncpa [#allocation6], 0
    %12 = vsyncpa [#allocation9], 0
    %13 = vsyncpa [#allocation4], 0
    // Predicated region
    $region2: #{tpu_custom_call.1} parent=1 // pred_check
      _
    $region3: #{tpu_custom_call.1} parent=1 // pred_check_branch
      %15 = sbr.rel (0) target = $region5
    $region4: #{tpu_custom_call.1} parent=1 // pred_region
      %17 = vsyncadd [#allocation3], 0
      %s19 = sshll.u32 %s0, 4
      %s20 = int_to_ptr.hbm [resolvable:$true] %s19
      %s21 = sshll.u32 [#allocation2], 4
      %s22 = int_to_ptr.vmem [resolvable:$true] %s21
      %24 = dma.hbm_to_vmem [thread:$0]  %s20, 128, %s22, [#allocation3]
    $region5: #{tpu_custom_call.1} parent=1 // pred_fallthru
      _
    // Predicated region
    $region6: #{tpu_custom_call.1} parent=1 // pred_check
      _
    $region7: #{tpu_custom_call.1} parent=1 // pred_check_branch
      %26 = sbr.rel (0) target = $region9
    $region8: #{tpu_custom_call.1} parent=1 // pred_region
      %28 = vsyncadd [#allocation6], 0
      %s29 = sshll.u32 %s1, 4
      %s30 = int_to_ptr.hbm [resolvable:$true] %s29
      %s31 = sshll.u32 [#allocation5], 4
      %s32 = int_to_ptr.vmem [resolvable:$true] %s31
      %37 = dma.hbm_to_vmem [thread:$0]  %s30, 256, %s32, [#allocation6], 128, 128, 8
    $region9: #{tpu_custom_call.1} parent=1 // pred_fallthru
      _
    // Predicated region
    $region10: #{tpu_custom_call.1} parent=1 // pred_check
      _
    $region11: #{tpu_custom_call.1} parent=1 // pred_check_branch
      %39 = sbr.rel (0) target = $region13
    $region12: #{tpu_custom_call.1} parent=1 // pred_region
      %41 = vsyncadd [#allocation6], 0
      %s42 = sshll.u32 %s2, 4
      %s43 = int_to_ptr.hbm [resolvable:$true] %s42
      %s44 = sshll.u32 [#allocation7], 4
      %s45 = int_to_ptr.vmem [resolvable:$true] %s44
      %50 = dma.hbm_to_vmem [thread:$0]  %s43, 2048, %s45, [#allocation6], 128, 128, 8
    $region13: #{tpu_custom_call.1} parent=1 // pred_fallthru
      _
    // Predicated region
    $region14: #{tpu_custom_call.1} parent=1 // pred_check
      _
    $region15: #{tpu_custom_call.1} parent=1 // pred_check_branch
      %52 = sbr.rel (0) target = $region17
    $region16: #{tpu_custom_call.1} parent=1 // pred_region
      %54 = vsyncadd [#allocation9], 0
      %s55 = sshll.u32 %s3, 4
      %s56 = int_to_ptr.hbm [resolvable:$true] %s55
      %s57 = sshll.u32 [#allocation8], 4
      %s58 = int_to_ptr.vmem [resolvable:$true] %s57
      %63 = dma.hbm_to_vmem [thread:$0]  %s56, 2048, %s58, [#allocation9], 128, 128, 8
    $region17: #{tpu_custom_call.1} parent=1 // pred_fallthru
      _
    // Predicated region
    $region18: #{tpu_custom_call.1} parent=1 // pred_check
      _
    $region19: #{tpu_custom_call.1} parent=1 // pred_check_branch
      %65 = sbr.rel (0) target = $region21
    $region20: #{tpu_custom_call.1} parent=1 // pred_region
      _
    $region21: #{tpu_custom_call.1} parent=1 // pred_fallthru
      _
    // Predicated region
    $region22: #{tpu_custom_call.1} parent=1 // pred_check
      _
    $region23: #{tpu_custom_call.1} parent=1 // pred_check_branch
      %67 = sbr.rel (0) target = $region25
    $region24: #{tpu_custom_call.1} parent=1 // pred_region
      %69 = dma.done [#allocation3], 128
    $region25: #{tpu_custom_call.1} parent=1 // pred_fallthru
      _
    // Predicated region
    $region26: #{tpu_custom_call.1} parent=1 // pred_check
      _
    $region27: #{tpu_custom_call.1} parent=1 // pred_check_branch
      %71 = sbr.rel (0) target = $region29
    $region28: #{tpu_custom_call.1} parent=1 // pred_region
      %73 = dma.done [#allocation6], 256
    $region29: #{tpu_custom_call.1} parent=1 // pred_fallthru
      _
    // Predicated region
    $region30: #{tpu_custom_call.1} parent=1 // pred_check
      _
    $region31: #{tpu_custom_call.1} parent=1 // pred_check_branch
      %75 = sbr.rel (0) target = $region33
    $region32: #{tpu_custom_call.1} parent=1 // pred_region
      %77 = dma.done [#allocation6], 2048
    $region33: #{tpu_custom_call.1} parent=1 // pred_fallthru
      _
    // Predicated region
    $region34: #{tpu_custom_call.1} parent=1 // pred_check
      _
    $region35: #{tpu_custom_call.1} parent=1 // pred_check_branch
      %79 = sbr.rel (0) target = $region37
    $region36: #{tpu_custom_call.1} parent=1 // pred_region
      %81 = dma.done [#allocation9], 2048
    $region37: #{tpu_custom_call.1} parent=1 // pred_fallthru
      _
    %v82 = vld [vmem:[%s4] sm:$0x1]
    %v83 = vld [vmem:[%s4 + $0x1] sm:$0x1]
    %v84 = vld [vmem:[%s4 + $0x2] sm:$0x1]
    %v85 = vld [vmem:[#allocation2] sm:$0xff]
    %v86 = vld [vmem:[#allocation5] sm:$0xff]
    %v87 = vld [vmem:[#allocation5 + $0x8] sm:$0xff]
    %v89 = vperm.slane %v82, 0
    %vm91 = vcmask 130048
    %v93 = vsel %vm91, %v85, 0
    %95 = vmatpush.msra.mxu0 0.0
    %96 = vmatpush.msra.mxu0 0.0
    %97 = vmatpush.msra.mxu0 0.0
    %98 = vmatpush.msra.mxu0 0.0
    %99 = vmatpush.msra.mxu0 0.0
    %100 = vmatpush.msra.mxu0 0.0
    %101 = vmatpush.msra.mxu0 0.0
    %102 = vmatpush.msra.mxu0 0.0
    %103 = vmatpush.msra.mxu0 0.0
    %104 = vmatpush.msra.mxu0 0.0
    %105 = vmatpush.msra.mxu0 0.0
    %106 = vmatpush.msra.mxu0 0.0
    %107 = vmatpush.msra.mxu0 0.0
    %108 = vmatpush.msra.mxu0 0.0
    %109 = vmatpush.msra.mxu0 %v87
    %110 = vmatpush.msra.mxu0 %v86
    %111 = vmatmul.f32.gmra.mxu0 %v93
    %v112 = vpop.f32.mrf.mxu0
    %v113 = vadd.f32 %v89, %v112
    %114 = vdwg.mxu0
    %v115 = vmax.f32 %v113, 0.0
    %v116 = vld [vmem:[#allocation7] sm:$0xff]
    %v117 = vld [vmem:[#allocation7 + $0x8] sm:$0xff]
    %v118 = vld [vmem:[#allocation7 + $0x10] sm:$0xff]
    %v119 = vld [vmem:[#allocation7 + $0x18] sm:$0xff]
    %v120 = vld [vmem:[#allocation7 + $0x20] sm:$0xff]
    %v121 = vld [vmem:[#allocation7 + $0x28] sm:$0xff]
    %v122 = vld [vmem:[#allocation7 + $0x30] sm:$0xff]
    %v123 = vld [vmem:[#allocation7 + $0x38] sm:$0xff]
    %v124 = vld [vmem:[#allocation7 + $0x40] sm:$0xff]
    %v125 = vld [vmem:[#allocation7 + $0x48] sm:$0xff]
    %v126 = vld [vmem:[#allocation7 + $0x50] sm:$0xff]
    %v127 = vld [vmem:[#allocation7 + $0x58] sm:$0xff]
    %v128 = vld [vmem:[#allocation7 + $0x60] sm:$0xff]
    %v129 = vld [vmem:[#allocation7 + $0x68] sm:$0xff]
    %v130 = vld [vmem:[#allocation7 + $0x70] sm:$0xff]
    %v131 = vld [vmem:[#allocation7 + $0x78] sm:$0xff]
    %v133 = vperm.slane %v83, 0
    %135 = vmatpush.msra.mxu0 %v131
    %136 = vmatpush.msra.mxu0 %v130
    %137 = vmatpush.msra.mxu0 %v129
    %138 = vmatpush.msra.mxu0 %v128
    %139 = vmatpush.msra.mxu0 %v127
    %140 = vmatpush.msra.mxu0 %v126
    %141 = vmatpush.msra.mxu0 %v125
    %142 = vmatpush.msra.mxu0 %v124
    %143 = vmatpush.msra.mxu0 %v123
    %144 = vmatpush.msra.mxu0 %v122
    %145 = vmatpush.msra.mxu0 %v121
    %146 = vmatpush.msra.mxu0 %v120
    %147 = vmatpush.msra.mxu0 %v119
    %148 = vmatpush.msra.mxu0 %v118
    %149 = vmatpush.msra.mxu0 %v117
    %150 = vmatpush.msra.mxu0 %v116
    %151 = vmatmul.f32.gmra.mxu0 %v115
    %v152 = vpop.f32.mrf.mxu0
    %v153 = vadd.f32 %v133, %v152
    %154 = vdwg.mxu0
    %v155 = vmax.f32 %v153, 0.0
    %v156 = vld [vmem:[#allocation8] sm:$0xff]
    %v157 = vld [vmem:[#allocation8 + $0x8] sm:$0xff]
    %v158 = vld [vmem:[#allocation8 + $0x10] sm:$0xff]
    %v159 = vld [vmem:[#allocation8 + $0x18] sm:$0xff]
    %v160 = vld [vmem:[#allocation8 + $0x20] sm:$0xff]
    %v161 = vld [vmem:[#allocation8 + $0x28] sm:$0xff]
    %v162 = vld [vmem:[#allocation8 + $0x30] sm:$0xff]
    %v163 = vld [vmem:[#allocation8 + $0x38] sm:$0xff]
    %v164 = vld [vmem:[#allocation8 + $0x40] sm:$0xff]
    %v165 = vld [vmem:[#allocation8 + $0x48] sm:$0xff]
    %v166 = vld [vmem:[#allocation8 + $0x50] sm:$0xff]
    %v167 = vld [vmem:[#allocation8 + $0x58] sm:$0xff]
    %v168 = vld [vmem:[#allocation8 + $0x60] sm:$0xff]
    %v169 = vld [vmem:[#allocation8 + $0x68] sm:$0xff]
    %v170 = vld [vmem:[#allocation8 + $0x70] sm:$0xff]
    %v171 = vld [vmem:[#allocation8 + $0x78] sm:$0xff]
    %v173 = vperm.slane %v84, 0
    %175 = vmatpush.msra.mxu0 %v171
    %176 = vmatpush.msra.mxu0 %v170
    %177 = vmatpush.msra.mxu0 %v169
    %178 = vmatpush.msra.mxu0 %v168
    %179 = vmatpush.msra.mxu0 %v167
    %180 = vmatpush.msra.mxu0 %v166
    %181 = vmatpush.msra.mxu0 %v165
    %182 = vmatpush.msra.mxu0 %v164
    %183 = vmatpush.msra.mxu0 %v163
    %184 = vmatpush.msra.mxu0 %v162
    %185 = vmatpush.msra.mxu0 %v161
    %186 = vmatpush.msra.mxu0 %v160
    %187 = vmatpush.msra.mxu0 %v159
    %188 = vmatpush.msra.mxu0 %v158
    %189 = vmatpush.msra.mxu0 %v157
    %190 = vmatpush.msra.mxu0 %v156
    %191 = vmatmul.f32.gmra.mxu0 %v155
    %v192 = vpop.f32.mrf.mxu0
    %v193 = vadd.f32 %v173, %v192
    %194 = vdwg.mxu0
    %vm195 = vcmask 64512
    %196 = vst.msk [vmem:[#allocation10] sm:$0xff] %vm195, %v193
    // Predicated region
    $region38: #{tpu_custom_call.1} parent=1 // pred_check
      _
    $region39: #{tpu_custom_call.1} parent=1 // pred_check_branch
      %198 = sbr.rel (0) target = $region41
    $region40: #{tpu_custom_call.1} parent=1 // pred_region
      %200 = vsyncadd [#allocation4], 0
      %s202 = sshll.u32 [#allocation10], 4
      %s203 = int_to_ptr.vmem [resolvable:$true] %s202
      %s204 = sshll.u32 %s5, 4
      %s205 = int_to_ptr.hbm [resolvable:$true] %s204
      %207 = dma.vmem_to_hbm [thread:$0]  %s203, 128, %s205, [#allocation4]
    $region41: #{tpu_custom_call.1} parent=1 // pred_fallthru
      _
    // Predicated region
    $region42: #{tpu_custom_call.1} parent=1 // pred_check
      _
    $region43: #{tpu_custom_call.1} parent=1 // pred_check_branch
      %209 = sbr.rel (0) target = $region45
    $region44: #{tpu_custom_call.1} parent=1 // pred_region
      %211 = dma.done [#allocation4], 128
    $region45: #{tpu_custom_call.1} parent=1 // pred_fallthru
      _
    %212 = vsyncpa [#allocation3], 1
    %213 = vsyncpa [#allocation6], 1
    %214 = vsyncpa [#allocation9], 1
    %215 = vsyncpa [#allocation4], 1

</llo_original>
